<compile_context>
chip_gen: v7x
topology: tpu7x:2x2x1
jax: 0.10.0
libtpu: 0.0.40
codegen_flags: <defaults>
</compile_context>

<pallas_src>
import jax
import jax.numpy as jnp
from jax.experimental import pallas as pl
from jax.experimental.pallas import tpu as pltpu

_LANE = 128


def conv1x1_kernel(x_ref, w_ref, b_ref, o_ref):
    # x_ref: VMEM (bn, C_in, S_t, 128)   w_ref: SMEM (C_out*C_in,)  flat
    # b_ref: SMEM (C_out,)               o_ref: VMEM (bn, C_out, S_t, 128)
    C_in = x_ref.shape[1]
    C_out = o_ref.shape[1]

    acc = [None] * C_out
    # ci-outer: each input channel slab is read once and feeds all C_out accumulators.
    for ci in range(C_in):                                   # static -> unrolled
        x_ci = x_ref[:, ci, :, :].astype(jnp.float32)        # dense (bn, S_t, 128) slab
        for co in range(C_out):                              # static (C_out == 2)
            term = w_ref[co * C_in + ci] * x_ci
            acc[co] = term if acc[co] is None else acc[co] + term
    for co in range(C_out):
        # full-lane-width (multiple-of-128) stores
        o_ref[:, co, :, :] = (acc[co] + b_ref[co]).astype(o_ref.dtype)


def _select_tiles(N, C, C_out, S, itemsize, target_step_bytes):
    """Pick (bn, s_t): batch-tile and spatial-sublane-tile for blocks (bn, C, s_t, 128)."""
    try:
        info = pltpu.get_tpu_info()
        vmem_cap = int(getattr(info, "vmem_capacity_bytes", 64 * 1024 * 1024))
    except Exception:
        vmem_cap = 64 * 1024 * 1024
    # budget for double-buffered input + output blocks (leave plenty of headroom)
    vmem_budget = min(vmem_cap // 4, 16 * 1024 * 1024)

    row_bytes_in = C * _LANE * itemsize                 # one sublane-row of the input block
    row_bytes_io = (C + C_out) * _LANE * itemsize

    # Spatial tile: hit the per-step byte target, capped by the VMEM budget.
    s_cap = max(8, vmem_budget // (2 * row_bytes_io))
    s_t = min(S, max(8, target_step_bytes // row_bytes_in), s_cap)
    s_t = S if s_t >= S else (s_t // 8) * 8             # multiple of 8 unless full extent

    # Batch tile: if one spatial tile already covers S and steps are small, batch N.
    bn = 1
    if s_t == S:
        step_bytes = S * row_bytes_in
        if step_bytes < target_step_bytes:
            bn = min(
                N,
                max(1, target_step_bytes // max(1, step_bytes)),
                max(1, vmem_budget // (2 * S * row_bytes_io)),
            )

    # Keep >= 2 grid steps (v7x megacore) whenever the problem is splittable.
    if pl.cdiv(N, bn) * pl.cdiv(S, s_t) < 2:
        if bn > 1:
            bn = (bn + 1) // 2
        elif S >= 16:
            half = ((pl.cdiv(S, 2) + 7) // 8) * 8
            if half < S:
                s_t = half
    return bn, s_t


def unknown_classifier_forward(x_nchw, weight, bias, *, target_step_bytes=2 * 1024 * 1024):
    """Forward pass of unknownClassifier (nn.Conv2d(in_channels, 2, kernel_size=1)).

    x_nchw : (N, C_in, H, W)
    weight : (C_out, C_in, 1, 1)   (C_out == 2)
    bias   : (C_out,)
    returns: (N, C_out, H, W)
    """
    N, C, H, W = x_nchw.shape
    C_out = weight.shape[0]
    HW = H * W
    itemsize = x_nchw.dtype.itemsize

    # Dense (N, C, S, 128) view of the spatial axis.  Free when HW % 128 == 0; only
    # non-lane-aligned HW pays a pad (in) / slice (out) round-trip.
    HW_pad = ((HW + _LANE - 1) // _LANE) * _LANE
    x3 = x_nchw.reshape(N, C, HW)
    if HW_pad != HW:
        x3 = jnp.pad(x3, ((0, 0), (0, 0), (0, HW_pad - HW)))
    S = HW_pad // _LANE
    x4 = x3.reshape(N, C, S, _LANE)

    w_flat = weight.reshape(C_out * C)     # tiny -> 1-D SMEM (packs tightly)
    b_flat = bias.reshape(C_out)

    bn, s_t = _select_tiles(N, C, C_out, S, itemsize, target_step_bytes)
    grid = (pl.cdiv(N, bn), pl.cdiv(S, s_t))

    # VMEM limit sized to the double-buffered blocks (with slack), >= 32 MiB default.
    in_blk = bn * C * s_t * _LANE * itemsize
    out_blk = bn * C_out * s_t * _LANE * itemsize
    vmem_limit = min(max(32 * 1024 * 1024, 2 * (in_blk + out_blk) + (4 << 20)), 128 << 20)

    out4 = pl.pallas_call(
        conv1x1_kernel,
        out_shape=jax.ShapeDtypeStruct((N, C_out, S, _LANE), x_nchw.dtype),
        grid_spec=pltpu.PrefetchScalarGridSpec(
            num_scalar_prefetch=0,
            grid=grid,
            in_specs=[
                pl.BlockSpec((bn, C, s_t, _LANE), lambda nb, t: (nb, 0, t, 0)),  # activations
                pl.BlockSpec(memory_space=pltpu.MemorySpace.SMEM),               # weight (flat)
                pl.BlockSpec(memory_space=pltpu.MemorySpace.SMEM),               # bias
            ],
            out_specs=pl.BlockSpec((bn, C_out, s_t, _LANE), lambda nb, t: (nb, 0, t, 0)),
        ),
        compiler_params=pltpu.CompilerParams(
            dimension_semantics=("parallel", "parallel"),
            vmem_limit_bytes=vmem_limit,
        ),
    )(x4, w_flat, b_flat)

    if HW_pad != HW:
        out = out4.reshape(N, C_out, HW_pad)[:, :, :HW]
        return out.reshape(N, C_out, H, W)
    return out4.reshape(N, C_out, H, W)


def _reference(x, weight, bias):
    C_out, C_in = weight.shape[0], weight.shape[1]
    return (jnp.einsum("nchw,oc->nohw", x, weight.reshape(C_out, C_in))
            + bias[None, :, None, None])


if __name__ == "__main__":
    key = jax.random.PRNGKey(0)
    k_x, k_w, k_b, k_x2 = jax.random.split(key, 4)

    N, C_in, H, W = 2, 4, 16, 16
    C_out = 2

    x = jax.random.normal(k_x, (N, C_in, H, W), dtype=jnp.float32)
    weight = jax.random.normal(k_w, (C_out, C_in, 1, 1), dtype=jnp.float32) * 0.1
    bias = jax.random.normal(k_b, (C_out,), dtype=jnp.float32) * 0.01

    # Lane-aligned spatial size (HW = 256): pad/slice-free dense path.
    out = jax.block_until_ready(unknown_classifier_forward(x, weight, bias))
    ref = _reference(x, weight, bias)
    assert out.shape == (N, C_out, H, W)
    assert jnp.allclose(out, ref, atol=1e-5, rtol=1e-5)

    # Non-lane-aligned spatial size (HW = 63): exercises the padded-tail fallback.
    x_odd = jax.random.normal(k_x2, (1, C_in, 7, 9), dtype=jnp.float32)
    out_odd = jax.block_until_ready(unknown_classifier_forward(x_odd, weight, bias))
    ref_odd = _reference(x_odd, weight, bias)
    assert out_odd.shape == (1, C_out, 7, 9)
    assert jnp.allclose(out_odd, ref_odd, atol=1e-5, rtol=1e-5)

    print("KERNEL_OK")
</pallas_src>

<mosaic_0001>
module attributes {stable_mosaic.version = 11 : i64} {
  func.func @conv1x1_kernel(%arg0: i32, %arg1: i32, %arg2: memref<1x4x2x128xf32, #tpu.memory_space<vmem>>, %arg3: memref<8xf32, #tpu.memory_space<smem>>, %arg4: memref<2xf32, #tpu.memory_space<smem>>, %arg5: memref<1x2x2x128xf32, #tpu.memory_space<vmem>>) attributes {dimension_semantics = [#tpu.dimension_semantics<parallel>, #tpu.dimension_semantics<parallel>], iteration_bounds = array<i64: 2, 1>, scalar_prefetch = 0 : i64, scratch_operands = 0 : i64, tpu.core_type = #tpu.core_type<tc>, window_params = [{transform_indices = @transform_0, window_bounds = array<i64: 1, 4, 2, 128>}, {transform_indices = @transform_1, window_bounds = array<i64: 8>}, {transform_indices = @transform_2, window_bounds = array<i64: 2>}, {transform_indices = @transform_3, window_bounds = array<i64: 1, 2, 2, 128>}]} {
    %c0 = arith.constant 0 : index
    %c0_0 = arith.constant 0 : index
    %c0_1 = arith.constant 0 : index
    %c0_2 = arith.constant 0 : index
    %0 = vector.load %arg2[%c0, %c0_0, %c0_1, %c0_2] : memref<1x4x2x128xf32, #tpu.memory_space<vmem>>, vector<1x1x2x128xf32>
    %1 = vector.shape_cast %0 : vector<1x1x2x128xf32> to vector<1x2x128xf32>
    %c0_3 = arith.constant 0 : index
    %2 = memref.load %arg3[%c0_3] : memref<8xf32, #tpu.memory_space<smem>>
    %3 = vector.broadcast %2 : f32 to vector<1x2x128xf32>
    %4 = arith.mulf %3, %1 : vector<1x2x128xf32>
    %c4 = arith.constant 4 : index
    %5 = memref.load %arg3[%c4] : memref<8xf32, #tpu.memory_space<smem>>
    %6 = vector.broadcast %5 : f32 to vector<1x2x128xf32>
    %7 = arith.mulf %6, %1 : vector<1x2x128xf32>
    %c0_4 = arith.constant 0 : index
    %c1 = arith.constant 1 : index
    %c0_5 = arith.constant 0 : index
    %c0_6 = arith.constant 0 : index
    %8 = vector.load %arg2[%c0_4, %c1, %c0_5, %c0_6] : memref<1x4x2x128xf32, #tpu.memory_space<vmem>>, vector<1x1x2x128xf32>
    %9 = vector.shape_cast %8 : vector<1x1x2x128xf32> to vector<1x2x128xf32>
    %c1_7 = arith.constant 1 : index
    %10 = memref.load %arg3[%c1_7] : memref<8xf32, #tpu.memory_space<smem>>
    %11 = vector.broadcast %10 : f32 to vector<1x2x128xf32>
    %12 = arith.mulf %11, %9 : vector<1x2x128xf32>
    %13 = arith.addf %4, %12 : vector<1x2x128xf32>
    %c5 = arith.constant 5 : index
    %14 = memref.load %arg3[%c5] : memref<8xf32, #tpu.memory_space<smem>>
    %15 = vector.broadcast %14 : f32 to vector<1x2x128xf32>
    %16 = arith.mulf %15, %9 : vector<1x2x128xf32>
    %17 = arith.addf %7, %16 : vector<1x2x128xf32>
    %c0_8 = arith.constant 0 : index
    %c2 = arith.constant 2 : index
    %c0_9 = arith.constant 0 : index
    %c0_10 = arith.constant 0 : index
    %18 = vector.load %arg2[%c0_8, %c2, %c0_9, %c0_10] : memref<1x4x2x128xf32, #tpu.memory_space<vmem>>, vector<1x1x2x128xf32>
    %19 = vector.shape_cast %18 : vector<1x1x2x128xf32> to vector<1x2x128xf32>
    %c2_11 = arith.constant 2 : index
    %20 = memref.load %arg3[%c2_11] : memref<8xf32, #tpu.memory_space<smem>>
    %21 = vector.broadcast %20 : f32 to vector<1x2x128xf32>
    %22 = arith.mulf %21, %19 : vector<1x2x128xf32>
    %23 = arith.addf %13, %22 : vector<1x2x128xf32>
    %c6 = arith.constant 6 : index
    %24 = memref.load %arg3[%c6] : memref<8xf32, #tpu.memory_space<smem>>
    %25 = vector.broadcast %24 : f32 to vector<1x2x128xf32>
    %26 = arith.mulf %25, %19 : vector<1x2x128xf32>
    %27 = arith.addf %17, %26 : vector<1x2x128xf32>
    %c0_12 = arith.constant 0 : index
    %c3 = arith.constant 3 : index
    %c0_13 = arith.constant 0 : index
    %c0_14 = arith.constant 0 : index
    %28 = vector.load %arg2[%c0_12, %c3, %c0_13, %c0_14] : memref<1x4x2x128xf32, #tpu.memory_space<vmem>>, vector<1x1x2x128xf32>
    %29 = vector.shape_cast %28 : vector<1x1x2x128xf32> to vector<1x2x128xf32>
    %c3_15 = arith.constant 3 : index
    %30 = memref.load %arg3[%c3_15] : memref<8xf32, #tpu.memory_space<smem>>
    %31 = vector.broadcast %30 : f32 to vector<1x2x128xf32>
    %32 = arith.mulf %31, %29 : vector<1x2x128xf32>
    %33 = arith.addf %23, %32 : vector<1x2x128xf32>
    %c7 = arith.constant 7 : index
    %34 = memref.load %arg3[%c7] : memref<8xf32, #tpu.memory_space<smem>>
    %35 = vector.broadcast %34 : f32 to vector<1x2x128xf32>
    %36 = arith.mulf %35, %29 : vector<1x2x128xf32>
    %37 = arith.addf %27, %36 : vector<1x2x128xf32>
    %c0_16 = arith.constant 0 : index
    %38 = memref.load %arg4[%c0_16] : memref<2xf32, #tpu.memory_space<smem>>
    %39 = vector.broadcast %38 : f32 to vector<1x2x128xf32>
    %40 = arith.addf %33, %39 : vector<1x2x128xf32>
    %c0_17 = arith.constant 0 : index
    %c0_18 = arith.constant 0 : index
    %c0_19 = arith.constant 0 : index
    %c0_20 = arith.constant 0 : index
    %41 = vector.load %arg5[%c0_17, %c0_18, %c0_19, %c0_20] : memref<1x2x2x128xf32, #tpu.memory_space<vmem>>, vector<1x1x2x128xf32>
    %42 = vector.shape_cast %41 : vector<1x1x2x128xf32> to vector<1x2x128xf32>
    %43 = vector.shape_cast %40 : vector<1x2x128xf32> to vector<1x1x2x128xf32>
    tpu.vector_store %arg5[%c0_17, %c0_18, %c0_19, %c0_20], %43 {strides = array<i32>} : memref<1x2x2x128xf32, #tpu.memory_space<vmem>>, vector<1x1x2x128xf32>,
    %c1_21 = arith.constant 1 : index
    %44 = memref.load %arg4[%c1_21] : memref<2xf32, #tpu.memory_space<smem>>
    %45 = vector.broadcast %44 : f32 to vector<1x2x128xf32>
    %46 = arith.addf %37, %45 : vector<1x2x128xf32>
    %c0_22 = arith.constant 0 : index
    %c1_23 = arith.constant 1 : index
    %c0_24 = arith.constant 0 : index
    %c0_25 = arith.constant 0 : index
    %47 = vector.load %arg5[%c0_22, %c1_23, %c0_24, %c0_25] : memref<1x2x2x128xf32, #tpu.memory_space<vmem>>, vector<1x1x2x128xf32>
    %48 = vector.shape_cast %47 : vector<1x1x2x128xf32> to vector<1x2x128xf32>
    %49 = vector.shape_cast %46 : vector<1x2x128xf32> to vector<1x1x2x128xf32>
    tpu.vector_store %arg5[%c0_22, %c1_23, %c0_24, %c0_25], %49 {strides = array<i32>} : memref<1x2x2x128xf32, #tpu.memory_space<vmem>>, vector<1x1x2x128xf32>,
    return
  }
  func.func @transform_0(%arg0: i32, %arg1: i32) -> (i32, i32, i32, i32) {
    %c0_i32 = arith.constant 0 : i32
    %c0_i32_0 = arith.constant 0 : i32
    %c0_i32_1 = arith.constant 0 : i32
    return %arg0, %c0_i32, %arg1, %c0_i32_0 : i32, i32, i32, i32
  }
  func.func @transform_1(%arg0: i32, %arg1: i32) -> i32 {
    %c0_i32 = arith.constant 0 : i32
    %c0_i32_0 = arith.constant 0 : i32
    return %c0_i32 : i32
  }
  func.func @transform_2(%arg0: i32, %arg1: i32) -> i32 {
    %c0_i32 = arith.constant 0 : i32
    %c0_i32_0 = arith.constant 0 : i32
    return %c0_i32 : i32
  }
  func.func @transform_3(%arg0: i32, %arg1: i32) -> (i32, i32, i32, i32) {
    %c0_i32 = arith.constant 0 : i32
    %c0_i32_0 = arith.constant 0 : i32
    %c0_i32_1 = arith.constant 0 : i32
    return %arg0, %c0_i32, %arg1, %c0_i32_0 : i32, i32, i32, i32
  }
}

</mosaic_0001>

<llo_original>
// kernel: tpu_custom_call.1
$region0: #{tpu_custom_call.1}
  #allocation0 [shape = 'u32[]', space=smem, size = 0x4, offset = 0x4, fixed_abs, tag = 'smem constant byte address 0x4 - core index']
  #allocation1 [shape = 'u32[144,128]{1,0:T(1,128)}', space=vmem, size = 0x12000, scoped, tag = 'internal scratch']
  %s0 = inlined_call_operand.hbm [shape: f32[2,4,2,128], index: 0, kind: input, shape index: {}]
  %s1 = inlined_call_operand.vmem [shape: f32[8], index: 1, kind: input, shape index: {}]
  %s2 = inlined_call_operand.vmem [shape: f32[2], index: 2, kind: input, shape index: {}]
  %s3 = inlined_call_operand.hbm [shape: f32[2,2,2,128], index: 3, kind: output, shape index: {}]
  %s4 = sld [smem:[#allocation0]]
  $region57: #{tpu_custom_call.1} parent=0
    _
  %s6 = ssub.s32 1, %s4
  %s7 = scalar_select 0, %s6, %s4
  $region1: #{tpu_custom_call.1} parent=0
    #allocation2 [shape = 'u8[8192]{0}', space=vmem, size = 0x2000, scoped, tag = 'input window, operand 0']
    #allocation3 [shape = 's32[2]{0}', space=sflag, size = 0x8, scoped, tag = 'scoped memory for tpu_custom_call.1']
    #allocation4 [shape = 's32[2]{0}', space=sflag, size = 0x8, scoped, tag = 'scoped memory for tpu_custom_call.1']
    #allocation5 [shape = 's32[2]{0}', space=sflag, size = 0x8, scoped, tag = 'scoped memory for tpu_custom_call.1']
    #allocation6 [shape = 'u8[512]{0}', space=smem, size = 0x200, scoped, tag = 'input window, operand 1, single buffered']
    #allocation7 [shape = 'u8[512]{0}', space=smem, size = 0x200, scoped, tag = 'input window, operand 2, single buffered']
    #allocation8 [shape = 's32[1]{0}', space=sflag, size = 0x4, scoped, tag = 'scoped memory for tpu_custom_call.1']
    #allocation9 [shape = 'u8[4096]{0}', space=vmem, size = 0x1000, scoped, tag = 'output window, operand 0']
    %8 = vsyncpa [#allocation3], 0
    %s9 = scalar_lea.sflag [#allocation3], 1
    %10 = vsyncpa %s9, 0
    %11 = vsyncpa [#allocation5], 0
    %12 = vsyncpa [#allocation8], 0
    %13 = vsyncpa [#allocation4], 0
    %s14 = scalar_lea.sflag [#allocation4], 1
    %15 = vsyncpa %s14, 0
    loop: start=0, step=1, limit=4
    $region2: #{tpu_custom_call.1} parent=1 // loop_pre_header
      _
    $region3: #{tpu_custom_call.1} parent=1 // loop_header
      %s17 = sphi 0, %s21
      %p18 = scmp.ge.s32.totalorder %s17, 4
      %s24 = sphi 0, %s36
      %s25 = sphi 0, %s32
      %s26 = sphi 0, %s24
      %s27 = sphi 0, %s25
      %s28 = sphi 0, %s26
      %s29 = sphi 0, %s27
      %s41 = sphi 0, %s43
      %s44 = sphi 0, %s41
      %s45 = sphi 0, %s44
      %s61 = sphi 0, %s45
      %s65 = sphi 0, %s65
      %s67 = sphi 0, %s65
      %s68 = sphi 0, %s67
      %s82 = sphi 0, %s68
      %s86 = sphi 0, %s86
      %s88 = sphi 0, %s86
      %s89 = sphi 0, %s88
      %s103 = sphi 0, %s89
      %s111 = sphi 0, %s113
      %s114 = sphi 0, %s111
      %s115 = sphi 0, %s114
      %s131 = sphi 0, %s115
    $region4: #{tpu_custom_call.1} parent=1 // loop_header_branch
      %20 = sbr.rel (%p18) target = $region8
    $region5: #{tpu_custom_call.1} parent=1 // loop_body
      %s22 = ssub.s32 %s17, 1
      %s23 = ssub.s32 %s17, 2
      %s30 = sadd.s32 1, %s25
      %p31 = scmp.ge.s32.totalorder %s30, 1
      %s32 = scalar_select %p31, 0, %s30
      %s33 = sadd.s32 1, %s24
      %s34 = scalar_select %p31, %s33, %s24
      %p35 = scmp.ge.s32.totalorder %s34, 2
      %s36 = scalar_select %p35, 0, %s34
      %s37 = ssub.s32 %s24, %s36
      %s38 = ssub.s32 %s25, %s32
      %s39 = sor.u32 %s37, %s38
      %p40 = scmp.eq.s32.totalorder %s39, 0
      %s42 = sadd.s32 %s41, 1
      %s43 = scalar_select %p40, %s41, %s42
      %p46 = pneg %p40
      %p47 = scmp.eq.s32.totalorder %s17, 1
      %p48 = por %p46, %p47
      %p49 = scmp.ne.s32.totalorder %s41, %s44
      %p50 = scmp.eq.s32.totalorder %s17, 0
      %p51 = por %p49, %p50
      %p52 = scmp.ne.s32.totalorder %s41, %s44
      %p53 = scmp.eq.s32.totalorder %s22, 1
      %p54 = por %p52, %p53
      %p55 = scmp.ne.s32.totalorder %s44, %s45
      %p56 = scmp.eq.s32.totalorder %s22, 0
      %p57 = por %p55, %p56
      %p58 = scmp.ne.s32.totalorder %s44, %s45
      %p59 = scmp.eq.s32.totalorder %s23, 1
      %p60 = por %p58, %p59
      %p62 = scmp.ne.s32.totalorder %s45, %s61
      %p63 = scmp.eq.s32.totalorder %s23, 0
      %p64 = por %p62, %p63
      %s66 = sadd.s32 %s65, 1
      %p69 = scmp.eq.s32.totalorder %s17, 1
      %p70 = scmp.ne.s32.totalorder %s65, %s67
      %p71 = scmp.eq.s32.totalorder %s17, 0
      %p72 = por %p70, %p71
      %p73 = scmp.ne.s32.totalorder %s65, %s67
      %p74 = scmp.eq.s32.totalorder %s22, 1
      %p75 = por %p73, %p74
      %p76 = scmp.ne.s32.totalorder %s67, %s68
      %p77 = scmp.eq.s32.totalorder %s22, 0
      %p78 = por %p76, %p77
      %p79 = scmp.ne.s32.totalorder %s67, %s68
      %p80 = scmp.eq.s32.totalorder %s23, 1
      %p81 = por %p79, %p80
      %p83 = scmp.ne.s32.totalorder %s68, %s82
      %p84 = scmp.eq.s32.totalorder %s23, 0
      %p85 = por %p83, %p84
      %s87 = sadd.s32 %s86, 1
      %p90 = scmp.eq.s32.totalorder %s17, 1
      %p91 = scmp.ne.s32.totalorder %s86, %s88
      %p92 = scmp.eq.s32.totalorder %s17, 0
      %p93 = por %p91, %p92
      %p94 = scmp.ne.s32.totalorder %s86, %s88
      %p95 = scmp.eq.s32.totalorder %s22, 1
      %p96 = por %p94, %p95
      %p97 = scmp.ne.s32.totalorder %s88, %s89
      %p98 = scmp.eq.s32.totalorder %s22, 0
      %p99 = por %p97, %p98
      %p100 = scmp.ne.s32.totalorder %s88, %s89
      %p101 = scmp.eq.s32.totalorder %s23, 1
      %p102 = por %p100, %p101
      %p104 = scmp.ne.s32.totalorder %s89, %s103
      %p105 = scmp.eq.s32.totalorder %s23, 0
      %p106 = por %p104, %p105
      %s107 = ssub.s32 %s24, %s36
      %s108 = ssub.s32 %s25, %s32
      %s109 = sor.u32 %s107, %s108
      %p110 = scmp.eq.s32.totalorder %s109, 0
      %s112 = sadd.s32 %s111, 1
      %s113 = scalar_select %p110, %s111, %s112
      %p116 = pneg %p110
      %p117 = scmp.eq.s32.totalorder %s17, 1
      %p118 = por %p116, %p117
      %p119 = scmp.ne.s32.totalorder %s111, %s114
      %p120 = scmp.eq.s32.totalorder %s17, 0
      %p121 = por %p119, %p120
      %p122 = scmp.ne.s32.totalorder %s111, %s114
      %p123 = scmp.eq.s32.totalorder %s22, 1
      %p124 = por %p122, %p123
      %p125 = scmp.ne.s32.totalorder %s114, %s115
      %p126 = scmp.eq.s32.totalorder %s22, 0
      %p127 = por %p125, %p126
      %p128 = scmp.ne.s32.totalorder %s114, %s115
      %p129 = scmp.eq.s32.totalorder %s23, 1
      %p130 = por %p128, %p129
      %p132 = scmp.ne.s32.totalorder %s115, %s131
      %p133 = scmp.eq.s32.totalorder %s23, 0
      %p134 = por %p132, %p133
      %p135 = scmp.le.s32.totalorder 1, %s17
      %p136 = scmp.lt.s32.totalorder %s17, 3
      %p137 = pnand %p135, %p136
      %p138 = pneg %p137
      // Predicated region
      $region9: #{tpu_custom_call.1} parent=5 // pred_check
        _
      $region10: #{tpu_custom_call.1} parent=5 // pred_check_branch
        %140 = sbr.rel (%p137) target = $region12
      $region11: #{tpu_custom_call.1} parent=5 // pred_region
        %s141 = ssub.s32 %s17, 1
        // Predicated region
        $region13: #{tpu_custom_call.1} parent=11 // pred_check
          %p142 = pneg %p78
        $region14: #{tpu_custom_call.1} parent=11 // pred_check_branch
          %144 = sbr.rel (%p142) target = $region16
        $region15: #{tpu_custom_call.1} parent=11 // pred_region
          %s146 = ssub.s32 16, 16
          %147 = vsyncadd [#allocation5], %s146
          %s149 = sshll.u32 %s1, 4
          %s150 = int_to_ptr.vmem [resolvable:$true] %s149
          %152 = dma.vmem_to_smem %s150, 16, [#allocation6], [#allocation5]
        $region16: #{tpu_custom_call.1} parent=11 // pred_fallthru
          _
        // Predicated region
        $region17: #{tpu_custom_call.1} parent=11 // pred_check
          %p153 = pneg %p99
        $region18: #{tpu_custom_call.1} parent=11 // pred_check_branch
          %155 = sbr.rel (%p153) target = $region20
        $region19: #{tpu_custom_call.1} parent=11 // pred_region
          %s157 = ssub.s32 16, 16
          %158 = vsyncadd [#allocation8], %s157
          %s160 = sshll.u32 %s2, 4
          %s161 = int_to_ptr.vmem [resolvable:$true] %s160
          %163 = dma.vmem_to_smem %s161, 16, [#allocation7], [#allocation8]
        $region20: #{tpu_custom_call.1} parent=11 // pred_fallthru
          _
      $region12: #{tpu_custom_call.1} parent=5 // pred_fallthru
        _
      %p164 = scmp.lt.s32.totalorder %s17, 2
      // Predicated region
      $region21: #{tpu_custom_call.1} parent=5 // pred_check
        %p165 = pneg %p164
      $region22: #{tpu_custom_call.1} parent=5 // pred_check_branch
        %167 = sbr.rel (%p165) target = $region24
      $region23: #{tpu_custom_call.1} parent=5 // pred_region
        // Predicated region
        $region25: #{tpu_custom_call.1} parent=23 // pred_check
          %p168 = pneg %p51
        $region26: #{tpu_custom_call.1} parent=23 // pred_check_branch
          %170 = sbr.rel (%p168) target = $region28
        $region27: #{tpu_custom_call.1} parent=23 // pred_region
          %s171 = sand.u32 %s41, 1
          %s172 = scalar_lea.sflag [#allocation3], %s171
          %s173 = sand.u32 %s41, 1
          %s174 = smul.addr %s173, 8
          %s175 = scalar_lea.vmem [#allocation2], %s174
          %s177 = ssub.s32 128, 128
          %178 = vsyncadd %s172, %s177
          %s179 = smul.addr %s24, 4
          %s180 = sadd.s32 %s25, %s179
          %s181 = smul.addr %s180, 32
          %s182 = scalar_lea.hbm %s0, %s181
          %s183 = sshll.u32 %s175, 4
          %s184 = int_to_ptr.vmem [resolvable:$true] %s183
          %189 = dma.hbm_to_vmem [thread:$0]  %s182, 128, %s184, %s172, 32, 32, 2
        $region28: #{tpu_custom_call.1} parent=23 // pred_fallthru
          _
      $region24: #{tpu_custom_call.1} parent=5 // pred_fallthru
        _
      %p190 = scmp.le.s32.totalorder 1, %s17
      %p191 = scmp.lt.s32.totalorder %s17, 3
      %p192 = pnand %p190, %p191
      %p193 = pneg %p192
      // Predicated region
      $region29: #{tpu_custom_call.1} parent=5 // pred_check
        _
      $region30: #{tpu_custom_call.1} parent=5 // pred_check_branch
        %195 = sbr.rel (%p192) target = $region32
      $region31: #{tpu_custom_call.1} parent=5 // pred_region
        %s196 = ssub.s32 %s17, 1
        %s197 = sand.u32 %s44, 1
        %s198 = scalar_lea.sflag [#allocation3], %s197
        %s199 = sand.u32 %s44, 1
        %s200 = smul.addr %s199, 8
        %s201 = scalar_lea.vmem [#allocation2], %s200
        // Predicated region
        $region33: #{tpu_custom_call.1} parent=31 // pred_check
          %p202 = pneg %p57
        $region34: #{tpu_custom_call.1} parent=31 // pred_check_branch
          %204 = sbr.rel (%p202) target = $region36
        $region35: #{tpu_custom_call.1} parent=31 // pred_region
          %205 = dma.done %s198, 128
        $region36: #{tpu_custom_call.1} parent=31 // pred_fallthru
          _
        // Predicated region
        $region37: #{tpu_custom_call.1} parent=31 // pred_check
          %p206 = pneg %p78
        $region38: #{tpu_custom_call.1} parent=31 // pred_check_branch
          %208 = sbr.rel (%p206) target = $region40
        $region39: #{tpu_custom_call.1} parent=31 // pred_region
          %209 = dma.done [#allocation5], 16
        $region40: #{tpu_custom_call.1} parent=31 // pred_fallthru
          _
        // Predicated region
        $region41: #{tpu_custom_call.1} parent=31 // pred_check
          %p210 = pneg %p99
        $region42: #{tpu_custom_call.1} parent=31 // pred_check_branch
          %212 = sbr.rel (%p210) target = $region44
        $region43: #{tpu_custom_call.1} parent=31 // pred_region
          %213 = dma.done [#allocation8], 16
        $region44: #{tpu_custom_call.1} parent=31 // pred_fallthru
          _
        %214 = sfence
        %s215 = sand.u32 %s44, 1
        %s216 = scalar_lea.sflag [#allocation3], %s215
        %s217 = sand.u32 %s44, 1
        %s218 = smul.addr %s217, 8
        %s219 = scalar_lea.vmem [#allocation2], %s218
        %p220 = pneg %p57
        %p221 = pneg %p54
        %p222 = pneg %p78
        %p223 = pneg %p75
        %p224 = pneg %p99
        %p225 = pneg %p96
        %p226 = pneg %p127
        %p227 = pneg %p124
        %s228 = sand.u32 %s114, 1
        %s229 = scalar_lea.sflag [#allocation4], %s228
        %s230 = sand.u32 %s114, 1
        %s231 = smul.addr %s230, 4
        %s232 = scalar_lea.vmem [#allocation9], %s231
        %v233 = vld [vmem:[%s201] sm:$0x3]
        %s234 = sld [smem:[#allocation6]]
        %v235 = vstv %s234
        %v236 = vmul.f32 %v235, %v233
        %s237 = sld [smem:[#allocation6 + $0x4]]
        %v238 = vstv %s237
        %v239 = vmul.f32 %v238, %v233
        %s240 = scalar_lea.vmem %s201, 2 [#allocation2]
        %v241 = vld [vmem:[%s240] sm:$0x3]
        %s242 = sld [smem:[#allocation6 + $0x1]]
        %v243 = vstv %s242
        %v244 = vmul.f32 %v243, %v241
        %v245 = vadd.f32 %v236, %v244
        %s246 = sld [smem:[#allocation6 + $0x5]]
        %v247 = vstv %s246
        %v248 = vmul.f32 %v247, %v241
        %v249 = vadd.f32 %v239, %v248
        %s250 = scalar_lea.vmem %s201, 4 [#allocation2]
        %v251 = vld [vmem:[%s250] sm:$0x3]
        %s252 = sld [smem:[#allocation6 + $0x2]]
        %v253 = vstv %s252
        %v254 = vmul.f32 %v253, %v251
        %v255 = vadd.f32 %v245, %v254
        %s256 = sld [smem:[#allocation6 + $0x6]]
        %v257 = vstv %s256
        %v258 = vmul.f32 %v257, %v251
        %v259 = vadd.f32 %v249, %v258
        %s260 = scalar_lea.vmem %s201, 6 [#allocation2]
        %v261 = vld [vmem:[%s260] sm:$0x3]
        %s262 = sld [smem:[#allocation6 + $0x3]]
        %v263 = vstv %s262
        %v264 = vmul.f32 %v263, %v261
        %v265 = vadd.f32 %v255, %v264
        %s266 = sld [smem:[#allocation6 + $0x7]]
        %v267 = vstv %s266
        %v268 = vmul.f32 %v267, %v261
        %v269 = vadd.f32 %v259, %v268
        %s270 = sld [smem:[#allocation7]]
        %v271 = vstv %s270
        %v272 = vadd.f32 %v265, %v271
        %273 = vst [vmem:[%s232] sm:$0x3] %v272
        %s274 = sld [smem:[#allocation7 + $0x1]]
        %v275 = vstv %s274
        %v276 = vadd.f32 %v269, %v275
        %s277 = scalar_lea.vmem %s232, 2 [#allocation9]
        %278 = vst [vmem:[%s277] sm:$0x3] %v276
        %s279 = sand.u32 %s114, 1
        %s280 = scalar_lea.sflag [#allocation4], %s279
        %s281 = sand.u32 %s114, 1
        %s282 = smul.addr %s281, 4
        %s283 = scalar_lea.vmem [#allocation9], %s282
        // Predicated region
        $region45: #{tpu_custom_call.1} parent=31 // pred_check
          %p284 = pneg %p124
        $region46: #{tpu_custom_call.1} parent=31 // pred_check_branch
          %286 = sbr.rel (%p284) target = $region48
        $region47: #{tpu_custom_call.1} parent=31 // pred_region
          %s288 = ssub.s32 64, 64
          %289 = vsyncadd %s280, %s288
          %s290 = smul.addr %s26, 2
          %s291 = sadd.s32 %s27, %s290
          %s292 = smul.addr %s291, 32
          %s293 = scalar_lea.hbm %s3, %s292
          %s294 = sshll.u32 %s283, 4
          %s295 = int_to_ptr.vmem [resolvable:$true] %s294
          %300 = dma.vmem_to_hbm [thread:$0]  %s295, 64, %s293, %s280, 32, 32, 2
        $region48: #{tpu_custom_call.1} parent=31 // pred_fallthru
          _
      $region32: #{tpu_custom_call.1} parent=5 // pred_fallthru
        _
      %p301 = scmp.le.s32.totalorder 2, %s17
      // Predicated region
      $region49: #{tpu_custom_call.1} parent=5 // pred_check
        %p302 = pneg %p301
      $region50: #{tpu_custom_call.1} parent=5 // pred_check_branch
        %304 = sbr.rel (%p302) target = $region52
      $region51: #{tpu_custom_call.1} parent=5 // pred_region
        %s305 = ssub.s32 %s17, 2
        // Predicated region
        $region53: #{tpu_custom_call.1} parent=51 // pred_check
          %p306 = pneg %p130
        $region54: #{tpu_custom_call.1} parent=51 // pred_check_branch
          %308 = sbr.rel (%p306) target = $region56
        $region55: #{tpu_custom_call.1} parent=51 // pred_region
          %s309 = sand.u32 %s115, 1
          %s310 = scalar_lea.sflag [#allocation4], %s309
          %s311 = sand.u32 %s115, 1
          %s312 = smul.addr %s311, 4
          %s313 = scalar_lea.vmem [#allocation9], %s312
          %314 = dma.done %s310, 64
        $region56: #{tpu_custom_call.1} parent=51 // pred_fallthru
          _
      $region52: #{tpu_custom_call.1} parent=5 // pred_fallthru
        _
    $region6: #{tpu_custom_call.1} parent=1 // loop_footer
      %s21 = sadd.s32 1, %s17
    $region7: #{tpu_custom_call.1} parent=1 // loop_footer_branch
      %16 = sbr.rel target = $region3
    $region8: #{tpu_custom_call.1} parent=1 // loop_exit
      _
    %315 = vsyncpa [#allocation3], 1
    %s316 = scalar_lea.sflag [#allocation3], 1
    %317 = vsyncpa %s316, 1
    %318 = vsyncpa [#allocation4], 1
    %s319 = scalar_lea.sflag [#allocation4], 1
    %320 = vsyncpa %s319, 1
    %321 = vsyncpa [#allocation5], 1
    %s322 = scalar_lea.sflag [#allocation5], 1
    %323 = vsyncpa %s322, 1
    %324 = vsyncpa [#allocation8], 1

</llo_original>
